<compile_context>
chip_gen: v7x
topology: tpu7x:2x2x1
jax: 0.10.0
libtpu: 0.0.40
codegen_flags: <defaults>
</compile_context>

<pallas_src>
import functools
import math

import jax
import jax.numpy as jnp
from jax import lax
from jax.experimental import pallas as pl
from jax.experimental.pallas import tpu as pltpu


def _round_up(x, m):
    return ((x + m - 1) // m) * m


def _pcc_kernel(i_ref, j_ref, out_ref, mom_ref, *, inv_n, sub_rows,
                rows_valid_last, ragged):
    """One grid step reduces one (Rt, 128) chunk of one batch element.

    Grid: (B, K); batch axis "parallel", chunk (reduction) axis "arbitrary", last.
      i_ref / j_ref : (Rt, 128) VMEM tiles (I = y_true, J = y_pred), HBM dtype.
      out_ref       : (8, 128) per-batch output tile (written only at k == K-1).
      mom_ref       : (5, 8, 128) f32 scratch holding vector-shaped partials
                      [sum_I, sum_J, sum_II, sum_JJ, sum_IJ].
    """
    k = pl.program_id(1)
    nk = pl.num_programs(1)

    rt = i_ref.shape[0]
    g = sub_rows // 8            # vregs per operand per sub-block
    n_sub = rt // sub_rows

    if ragged:
        # Valid-row count of this chunk (full chunks are fully valid; the last
        # chunk's count is a compile-time constant).
        rows_valid = jnp.where(k == nk - 1, rows_valid_last, rt)
        rel_rows = (lax.broadcasted_iota(jnp.int32, (g, 8, 128), 0) * 8
                    + lax.broadcasted_iota(jnp.int32, (g, 8, 128), 1))

    def body(it, carry):
        s_i, s_j, s_ii, s_jj, s_ij = carry
        r0 = pl.multiple_of(it * sub_rows, sub_rows)
        x = i_ref[pl.ds(r0, sub_rows), :].astype(jnp.float32).reshape(g, 8, 128)
        y = j_ref[pl.ds(r0, sub_rows), :].astype(jnp.float32).reshape(g, 8, 128)
        if ragged:
            m = (r0 + rel_rows) < rows_valid
            x = jnp.where(m, x, 0.0)
            y = jnp.where(m, y, 0.0)
        # Reducing the leading (vreg) axis is pure VPU adds — no per-step XLU.
        s_i = s_i + jnp.sum(x, axis=0)
        s_j = s_j + jnp.sum(y, axis=0)
        s_ii = s_ii + jnp.sum(x * x, axis=0)
        s_jj = s_jj + jnp.sum(y * y, axis=0)
        s_ij = s_ij + jnp.sum(x * y, axis=0)
        return (s_i, s_j, s_ii, s_jj, s_ij)

    zeros = jnp.zeros((8, 128), jnp.float32)
    init = (zeros, zeros, zeros, zeros, zeros)
    unroll = n_sub if n_sub <= 4 else 4
    s_i, s_j, s_ii, s_jj, s_ij = lax.fori_loop(0, n_sub, body, init,
                                               unroll=unroll)

    @pl.when(k == 0)
    def _():
        mom_ref[...] = jnp.zeros_like(mom_ref)

    mom_ref[0] += s_i
    mom_ref[1] += s_j
    mom_ref[2] += s_ii
    mom_ref[3] += s_jj
    mom_ref[4] += s_ij

    @pl.when(k == nk - 1)
    def _():
        # Single cross-lane (XLU) scalar reduction per batch element.
        sum_i = jnp.sum(mom_ref[0])
        sum_j = jnp.sum(mom_ref[1])
        sum_ii = jnp.sum(mom_ref[2])
        sum_jj = jnp.sum(mom_ref[3])
        sum_ij = jnp.sum(mom_ref[4])

        e_i = sum_i * inv_n          # B_bar = mean(y_true)
        e_j = sum_j * inv_n          # A_bar = mean(y_pred)
        top = sum_ij * inv_n - e_i * e_j
        var_i = jnp.maximum(sum_ii * inv_n - e_i * e_i, 0.0)
        var_j = jnp.maximum(sum_jj * inv_n - e_j * e_j, 0.0)
        pcc_b = top / jnp.sqrt(var_i * var_j)
        out_ref[...] = jnp.full(out_ref.shape, pcc_b, out_ref.dtype)


def pcc_loss(I, J, *, row_block=None):
    """I, J: (B, C, D, H, W) arrays. Returns scalar 1 - mean_b(PCC_b),
    matching PCC().forward(I, J) of the PyTorch reference."""
    assert I.shape == J.shape and I.ndim == 5
    B = I.shape[0]
    N = math.prod(I.shape[1:])
    itemsize = jnp.dtype(I.dtype).itemsize

    if row_block is None:
        # ~4 MiB per input block regardless of dtype (8 MiB double-buffered
        # per input) — big enough to amortize per-step overhead, small enough
        # for v7x's 64 MiB VMEM.
        row_block = max(64, (8192 * 4) // itemsize)
    assert row_block % 8 == 0

    R = -(-N // 128)                        # lane-dense rows per batch element
    Rt = min(row_block, _round_up(R, 8))    # chunk rows (multiple of 8)
    K = -(-R // Rt)                         # chunks along the reduction axis
    sub_rows = math.gcd(Rt, 64)             # rows per fori_loop sub-block
    rows_valid_last = R - (K - 1) * Rt      # valid rows of the (possibly ragged) last chunk
    ragged = rows_valid_last != Rt
    Np = R * 128

    def prep(x):
        x = x.reshape(B, N)                 # keep HBM dtype; cast in-kernel
        if Np != N:
            # Minimal pad: only the tail of the last 128-lane row. Skipped
            # entirely when N % 128 == 0 (the common case). Zero padding is
            # exact for raw-moment sums since the kernel divides by true N.
            x = jnp.pad(x, ((0, 0), (0, Np - N)))
        return x.reshape(B, R, 128)

    I2, J2 = prep(I), prep(J)

    kernel = functools.partial(
        _pcc_kernel, inv_n=1.0 / float(N), sub_rows=sub_rows,
        rows_valid_last=rows_valid_last, ragged=ragged)

    # Grant enough scoped VMEM for the double-buffered input blocks plus
    # headroom (v5e's scoped default is only 16 MiB); stays well under the
    # 64 MiB physical VMEM of v7x.
    block_bytes = Rt * 128 * itemsize
    vmem_limit = int(min(max(2 * 2 * block_bytes + (4 << 20), 32 << 20),
                         64 << 20))

    per_batch = pl.pallas_call(
        kernel,
        out_shape=jax.ShapeDtypeStruct((B, 8, 128), jnp.float32),
        grid=(B, K),
        in_specs=[
            pl.BlockSpec((pl.Squeezed(), Rt, 128), lambda b, k: (b, k, 0)),
            pl.BlockSpec((pl.Squeezed(), Rt, 128), lambda b, k: (b, k, 0)),
        ],
        out_specs=pl.BlockSpec((pl.Squeezed(), 8, 128), lambda b, k: (b, 0, 0)),
        scratch_shapes=[pltpu.VMEM((5, 8, 128), jnp.float32)],
        compiler_params=pltpu.CompilerParams(
            # Batch axis shards across TensorCores (megacore); the reduction
            # axis carries the moment accumulators and stays last.
            dimension_semantics=("parallel", "arbitrary"),
            vmem_limit_bytes=vmem_limit,
        ),
    )(I2, J2)

    return 1.0 - jnp.mean(per_batch[:, 0, 0])


def pcc_loss_ref(I, J):
    """Pure-JAX reference mirroring the PyTorch module."""
    reduce_dims = (1, 2, 3, 4)
    A_bar = jnp.mean(J, axis=reduce_dims, keepdims=True)
    B_bar = jnp.mean(I, axis=reduce_dims, keepdims=True)
    top = jnp.mean((J - A_bar) * (I - B_bar), axis=reduce_dims, keepdims=True)
    bottom = jnp.sqrt(
        jnp.mean((J - A_bar) ** 2, axis=reduce_dims, keepdims=True)
        * jnp.mean((I - B_bar) ** 2, axis=reduce_dims, keepdims=True)
    )
    return 1.0 - jnp.mean(top / bottom)


if __name__ == "__main__":
    key = jax.random.PRNGKey(0)

    def make(shape, k, dtype=jnp.float32):
        k1, k2 = jax.random.split(k)
        I = jax.random.normal(k1, shape, dtype=jnp.float32)
        J = 0.7 * I + 0.3 * jax.random.normal(k2, shape, dtype=jnp.float32)
        return I.astype(dtype), J.astype(dtype)

    cases = [
        # (shape, row_block, dtype, tol)
        ((2, 4, 4, 8, 8), None, jnp.float32, 1e-4),   # N=1024: aligned, K=1, no pad/mask
        ((2, 4, 8, 8, 8), 8, jnp.float32, 1e-4),      # N=2048, K=2: tiled reduction axis
        ((2, 4, 8, 9, 8), 8, jnp.float32, 1e-4),      # N=2304, K=3: ragged last chunk (mask)
        ((2, 3, 5, 7, 11), None, jnp.float32, 1e-4),  # N=1155: lane padding + ragged rows
        ((2, 4, 8, 8, 8), None, jnp.bfloat16, 1e-2),  # bf16 inputs, f32 accumulation
    ]
    for idx, (shape, rb, dtype, tol) in enumerate(cases):
        key, sub = jax.random.split(key)
        I, J = make(shape, sub, dtype)
        out = jax.block_until_ready(pcc_loss(I, J, row_block=rb))
        ref = jax.block_until_ready(
            pcc_loss_ref(I.astype(jnp.float32), J.astype(jnp.float32)))
        assert jnp.allclose(out, ref, atol=tol, rtol=tol), (idx, out, ref)

    print("KERNEL_OK")
</pallas_src>

<mosaic_0001>
module attributes {stable_mosaic.version = 11 : i64} {
  func.func @_pcc_kernel(%arg0: i32, %arg1: i32, %arg2: memref<1x8x128xf32, #tpu.memory_space<vmem>>, %arg3: memref<1x8x128xf32, #tpu.memory_space<vmem>>, %arg4: memref<1x8x128xf32, #tpu.memory_space<vmem>>, %arg5: memref<5x8x128xf32, #tpu.memory_space<vmem>>) attributes {dimension_semantics = [#tpu.dimension_semantics<parallel>, #tpu.dimension_semantics<arbitrary>], iteration_bounds = array<i64: 2, 1>, scalar_prefetch = 0 : i64, scratch_operands = 1 : i64, tpu.core_type = #tpu.core_type<tc>, window_params = [{transform_indices = @transform_0, window_bounds = array<i64: 1, 8, 128>}, {transform_indices = @transform_1, window_bounds = array<i64: 1, 8, 128>}, {transform_indices = @transform_2, window_bounds = array<i64: 1, 8, 128>}]} {
    %cst = arith.constant 0.000000e+00 : f32
    %0 = vector.broadcast %cst : f32 to vector<8x128xf32>
    %c0_i32 = arith.constant 0 : i32
    %c8_i32 = arith.constant 8 : i32
    %1 = arith.muli %c0_i32, %c8_i32 : i32
    %2 = tpu.assume_multiple %1, 8 : i32
    %c0 = arith.constant 0 : index
    %3 = arith.index_cast %2 : i32 to index
    %c0_0 = arith.constant 0 : index
    %4 = vector.load %arg2[%c0, %3, %c0_0] : memref<1x8x128xf32, #tpu.memory_space<vmem>>, vector<1x8x128xf32>
    %5 = vector.shape_cast %4 : vector<1x8x128xf32> to vector<8x128xf32>
    %6 = vector.shape_cast %5 : vector<8x128xf32> to vector<1x8x128xf32>
    %c0_1 = arith.constant 0 : index
    %7 = arith.index_cast %2 : i32 to index
    %c0_2 = arith.constant 0 : index
    %8 = vector.load %arg3[%c0_1, %7, %c0_2] : memref<1x8x128xf32, #tpu.memory_space<vmem>>, vector<1x8x128xf32>
    %9 = vector.shape_cast %8 : vector<1x8x128xf32> to vector<8x128xf32>
    %10 = vector.shape_cast %9 : vector<8x128xf32> to vector<1x8x128xf32>
    %cst_3 = arith.constant dense<0.000000e+00> : vector<8x128xf32>
    %11 = vector.multi_reduction <add>, %6, %cst_3 [0] : vector<1x8x128xf32> to vector<8x128xf32>
    %12 = arith.addf %0, %11 : vector<8x128xf32>
    %cst_4 = arith.constant dense<0.000000e+00> : vector<8x128xf32>
    %13 = vector.multi_reduction <add>, %10, %cst_4 [0] : vector<1x8x128xf32> to vector<8x128xf32>
    %14 = arith.addf %0, %13 : vector<8x128xf32>
    %15 = arith.mulf %6, %6 : vector<1x8x128xf32>
    %cst_5 = arith.constant dense<0.000000e+00> : vector<8x128xf32>
    %16 = vector.multi_reduction <add>, %15, %cst_5 [0] : vector<1x8x128xf32> to vector<8x128xf32>
    %17 = arith.addf %0, %16 : vector<8x128xf32>
    %18 = arith.mulf %10, %10 : vector<1x8x128xf32>
    %cst_6 = arith.constant dense<0.000000e+00> : vector<8x128xf32>
    %19 = vector.multi_reduction <add>, %18, %cst_6 [0] : vector<1x8x128xf32> to vector<8x128xf32>
    %20 = arith.addf %0, %19 : vector<8x128xf32>
    %21 = arith.mulf %6, %10 : vector<1x8x128xf32>
    %cst_7 = arith.constant dense<0.000000e+00> : vector<8x128xf32>
    %22 = vector.multi_reduction <add>, %21, %cst_7 [0] : vector<1x8x128xf32> to vector<8x128xf32>
    %23 = arith.addf %0, %22 : vector<8x128xf32>
    %c1_i32 = arith.constant 1 : i32
    %c0_i32_8 = arith.constant 0 : i32
    %24 = arith.cmpi eq, %arg1, %c0_i32_8 : i32
    %25 = arith.extui %24 : i1 to i32
    %c0_i32_9 = arith.constant 0 : i32
    %26 = arith.cmpi ne, %25, %c0_i32_9 : i32
    scf.if %26 {
      %cst_38 = arith.constant 0.000000e+00 : f32
      %60 = vector.broadcast %cst_38 : f32 to vector<5x8x128xf32>
      %c0_39 = arith.constant 0 : index
      %c0_40 = arith.constant 0 : index
      %c0_41 = arith.constant 0 : index
      %61 = vector.load %arg5[%c0_39, %c0_40, %c0_41] : memref<5x8x128xf32, #tpu.memory_space<vmem>>, vector<5x8x128xf32>
      tpu.vector_store %arg5[%c0_39, %c0_40, %c0_41], %60 {strides = array<i32>} : memref<5x8x128xf32, #tpu.memory_space<vmem>>, vector<5x8x128xf32>,
    } else {
    }
    %c0_10 = arith.constant 0 : index
    %c0_11 = arith.constant 0 : index
    %c0_12 = arith.constant 0 : index
    %27 = vector.load %arg5[%c0_10, %c0_11, %c0_12] : memref<5x8x128xf32, #tpu.memory_space<vmem>>, vector<1x8x128xf32>
    %28 = vector.shape_cast %27 : vector<1x8x128xf32> to vector<8x128xf32>
    %29 = arith.addf %28, %12 : vector<8x128xf32>
    %c0_13 = arith.constant 0 : index
    %c0_14 = arith.constant 0 : index
    %c0_15 = arith.constant 0 : index
    %30 = vector.load %arg5[%c0_13, %c0_14, %c0_15] : memref<5x8x128xf32, #tpu.memory_space<vmem>>, vector<1x8x128xf32>
    %31 = vector.shape_cast %30 : vector<1x8x128xf32> to vector<8x128xf32>
    %32 = vector.shape_cast %29 : vector<8x128xf32> to vector<1x8x128xf32>
    tpu.vector_store %arg5[%c0_13, %c0_14, %c0_15], %32 {strides = array<i32>} : memref<5x8x128xf32, #tpu.memory_space<vmem>>, vector<1x8x128xf32>,
    %c1 = arith.constant 1 : index
    %c0_16 = arith.constant 0 : index
    %c0_17 = arith.constant 0 : index
    %33 = vector.load %arg5[%c1, %c0_16, %c0_17] : memref<5x8x128xf32, #tpu.memory_space<vmem>>, vector<1x8x128xf32>
    %34 = vector.shape_cast %33 : vector<1x8x128xf32> to vector<8x128xf32>
    %35 = arith.addf %34, %14 : vector<8x128xf32>
    %c1_18 = arith.constant 1 : index
    %c0_19 = arith.constant 0 : index
    %c0_20 = arith.constant 0 : index
    %36 = vector.load %arg5[%c1_18, %c0_19, %c0_20] : memref<5x8x128xf32, #tpu.memory_space<vmem>>, vector<1x8x128xf32>
    %37 = vector.shape_cast %36 : vector<1x8x128xf32> to vector<8x128xf32>
    %38 = vector.shape_cast %35 : vector<8x128xf32> to vector<1x8x128xf32>
    tpu.vector_store %arg5[%c1_18, %c0_19, %c0_20], %38 {strides = array<i32>} : memref<5x8x128xf32, #tpu.memory_space<vmem>>, vector<1x8x128xf32>,
    %c2 = arith.constant 2 : index
    %c0_21 = arith.constant 0 : index
    %c0_22 = arith.constant 0 : index
    %39 = vector.load %arg5[%c2, %c0_21, %c0_22] : memref<5x8x128xf32, #tpu.memory_space<vmem>>, vector<1x8x128xf32>
    %40 = vector.shape_cast %39 : vector<1x8x128xf32> to vector<8x128xf32>
    %41 = arith.addf %40, %17 : vector<8x128xf32>
    %c2_23 = arith.constant 2 : index
    %c0_24 = arith.constant 0 : index
    %c0_25 = arith.constant 0 : index
    %42 = vector.load %arg5[%c2_23, %c0_24, %c0_25] : memref<5x8x128xf32, #tpu.memory_space<vmem>>, vector<1x8x128xf32>
    %43 = vector.shape_cast %42 : vector<1x8x128xf32> to vector<8x128xf32>
    %44 = vector.shape_cast %41 : vector<8x128xf32> to vector<1x8x128xf32>
    tpu.vector_store %arg5[%c2_23, %c0_24, %c0_25], %44 {strides = array<i32>} : memref<5x8x128xf32, #tpu.memory_space<vmem>>, vector<1x8x128xf32>,
    %c3 = arith.constant 3 : index
    %c0_26 = arith.constant 0 : index
    %c0_27 = arith.constant 0 : index
    %45 = vector.load %arg5[%c3, %c0_26, %c0_27] : memref<5x8x128xf32, #tpu.memory_space<vmem>>, vector<1x8x128xf32>
    %46 = vector.shape_cast %45 : vector<1x8x128xf32> to vector<8x128xf32>
    %47 = arith.addf %46, %20 : vector<8x128xf32>
    %c3_28 = arith.constant 3 : index
    %c0_29 = arith.constant 0 : index
    %c0_30 = arith.constant 0 : index
    %48 = vector.load %arg5[%c3_28, %c0_29, %c0_30] : memref<5x8x128xf32, #tpu.memory_space<vmem>>, vector<1x8x128xf32>
    %49 = vector.shape_cast %48 : vector<1x8x128xf32> to vector<8x128xf32>
    %50 = vector.shape_cast %47 : vector<8x128xf32> to vector<1x8x128xf32>
    tpu.vector_store %arg5[%c3_28, %c0_29, %c0_30], %50 {strides = array<i32>} : memref<5x8x128xf32, #tpu.memory_space<vmem>>, vector<1x8x128xf32>,
    %c4 = arith.constant 4 : index
    %c0_31 = arith.constant 0 : index
    %c0_32 = arith.constant 0 : index
    %51 = vector.load %arg5[%c4, %c0_31, %c0_32] : memref<5x8x128xf32, #tpu.memory_space<vmem>>, vector<1x8x128xf32>
    %52 = vector.shape_cast %51 : vector<1x8x128xf32> to vector<8x128xf32>
    %53 = arith.addf %52, %23 : vector<8x128xf32>
    %c4_33 = arith.constant 4 : index
    %c0_34 = arith.constant 0 : index
    %c0_35 = arith.constant 0 : index
    %54 = vector.load %arg5[%c4_33, %c0_34, %c0_35] : memref<5x8x128xf32, #tpu.memory_space<vmem>>, vector<1x8x128xf32>
    %55 = vector.shape_cast %54 : vector<1x8x128xf32> to vector<8x128xf32>
    %56 = vector.shape_cast %53 : vector<8x128xf32> to vector<1x8x128xf32>
    tpu.vector_store %arg5[%c4_33, %c0_34, %c0_35], %56 {strides = array<i32>} : memref<5x8x128xf32, #tpu.memory_space<vmem>>, vector<1x8x128xf32>,
    %c0_i32_36 = arith.constant 0 : i32
    %57 = arith.cmpi eq, %arg1, %c0_i32_36 : i32
    %58 = arith.extui %57 : i1 to i32
    %c0_i32_37 = arith.constant 0 : i32
    %59 = arith.cmpi ne, %58, %c0_i32_37 : i32
    scf.if %59 {
      %c0_38 = arith.constant 0 : index
      %c0_39 = arith.constant 0 : index
      %c0_40 = arith.constant 0 : index
      %60 = vector.load %arg5[%c0_38, %c0_39, %c0_40] : memref<5x8x128xf32, #tpu.memory_space<vmem>>, vector<1x8x128xf32>
      %61 = vector.shape_cast %60 : vector<1x8x128xf32> to vector<8x128xf32>
      %62 = vector.shape_cast %61 : vector<8x128xf32> to vector<1x8x128xf32>
      %cst_41 = arith.constant dense<0.000000e+00> : vector<1xf32>
      %63 = vector.multi_reduction <add>, %62, %cst_41 [1, 2] : vector<1x8x128xf32> to vector<1xf32>
      %64 = vector.shape_cast %63 : vector<1xf32> to vector<1x1x1xf32>
      %65 = vector.extract %64[0, 0, 0] : f32 from vector<1x1x1xf32>
      %c1_42 = arith.constant 1 : index
      %c0_43 = arith.constant 0 : index
      %c0_44 = arith.constant 0 : index
      %66 = vector.load %arg5[%c1_42, %c0_43, %c0_44] : memref<5x8x128xf32, #tpu.memory_space<vmem>>, vector<1x8x128xf32>
      %67 = vector.shape_cast %66 : vector<1x8x128xf32> to vector<8x128xf32>
      %68 = vector.shape_cast %67 : vector<8x128xf32> to vector<1x8x128xf32>
      %cst_45 = arith.constant dense<0.000000e+00> : vector<1xf32>
      %69 = vector.multi_reduction <add>, %68, %cst_45 [1, 2] : vector<1x8x128xf32> to vector<1xf32>
      %70 = vector.shape_cast %69 : vector<1xf32> to vector<1x1x1xf32>
      %71 = vector.extract %70[0, 0, 0] : f32 from vector<1x1x1xf32>
      %c2_46 = arith.constant 2 : index
      %c0_47 = arith.constant 0 : index
      %c0_48 = arith.constant 0 : index
      %72 = vector.load %arg5[%c2_46, %c0_47, %c0_48] : memref<5x8x128xf32, #tpu.memory_space<vmem>>, vector<1x8x128xf32>
      %73 = vector.shape_cast %72 : vector<1x8x128xf32> to vector<8x128xf32>
      %74 = vector.shape_cast %73 : vector<8x128xf32> to vector<1x8x128xf32>
      %cst_49 = arith.constant dense<0.000000e+00> : vector<1xf32>
      %75 = vector.multi_reduction <add>, %74, %cst_49 [1, 2] : vector<1x8x128xf32> to vector<1xf32>
      %76 = vector.shape_cast %75 : vector<1xf32> to vector<1x1x1xf32>
      %77 = vector.extract %76[0, 0, 0] : f32 from vector<1x1x1xf32>
      %c3_50 = arith.constant 3 : index
      %c0_51 = arith.constant 0 : index
      %c0_52 = arith.constant 0 : index
      %78 = vector.load %arg5[%c3_50, %c0_51, %c0_52] : memref<5x8x128xf32, #tpu.memory_space<vmem>>, vector<1x8x128xf32>
      %79 = vector.shape_cast %78 : vector<1x8x128xf32> to vector<8x128xf32>
      %80 = vector.shape_cast %79 : vector<8x128xf32> to vector<1x8x128xf32>
      %cst_53 = arith.constant dense<0.000000e+00> : vector<1xf32>
      %81 = vector.multi_reduction <add>, %80, %cst_53 [1, 2] : vector<1x8x128xf32> to vector<1xf32>
      %82 = vector.shape_cast %81 : vector<1xf32> to vector<1x1x1xf32>
      %83 = vector.extract %82[0, 0, 0] : f32 from vector<1x1x1xf32>
      %c4_54 = arith.constant 4 : index
      %c0_55 = arith.constant 0 : index
      %c0_56 = arith.constant 0 : index
      %84 = vector.load %arg5[%c4_54, %c0_55, %c0_56] : memref<5x8x128xf32, #tpu.memory_space<vmem>>, vector<1x8x128xf32>
      %85 = vector.shape_cast %84 : vector<1x8x128xf32> to vector<8x128xf32>
      %86 = vector.shape_cast %85 : vector<8x128xf32> to vector<1x8x128xf32>
      %cst_57 = arith.constant dense<0.000000e+00> : vector<1xf32>
      %87 = vector.multi_reduction <add>, %86, %cst_57 [1, 2] : vector<1x8x128xf32> to vector<1xf32>
      %88 = vector.shape_cast %87 : vector<1xf32> to vector<1x1x1xf32>
      %89 = vector.extract %88[0, 0, 0] : f32 from vector<1x1x1xf32>
      %cst_58 = arith.constant 9.765625E-4 : f32
      %90 = arith.mulf %65, %cst_58 : f32
      %cst_59 = arith.constant 9.765625E-4 : f32
      %91 = arith.mulf %71, %cst_59 : f32
      %cst_60 = arith.constant 9.765625E-4 : f32
      %92 = arith.mulf %89, %cst_60 : f32
      %93 = arith.mulf %90, %91 : f32
      %94 = arith.subf %92, %93 : f32
      %cst_61 = arith.constant 9.765625E-4 : f32
      %95 = arith.mulf %77, %cst_61 : f32
      %96 = arith.mulf %90, %90 : f32
      %97 = arith.subf %95, %96 : f32
      %cst_62 = arith.constant 0.000000e+00 : f32
      %98 = arith.maximumf %97, %cst_62 : f32
      %cst_63 = arith.constant 9.765625E-4 : f32
      %99 = arith.mulf %83, %cst_63 : f32
      %100 = arith.mulf %91, %91 : f32
      %101 = arith.subf %99, %100 : f32
      %cst_64 = arith.constant 0.000000e+00 : f32
      %102 = arith.maximumf %101, %cst_64 : f32
      %103 = arith.mulf %98, %102 : f32
      %104 = math.sqrt %103 : f32
      %105 = arith.divf %94, %104 : f32
      %106 = vector.broadcast %105 : f32 to vector<8x128xf32>
      %c0_65 = arith.constant 0 : index
      %c0_66 = arith.constant 0 : index
      %c0_67 = arith.constant 0 : index
      %107 = vector.load %arg4[%c0_65, %c0_66, %c0_67] : memref<1x8x128xf32, #tpu.memory_space<vmem>>, vector<1x8x128xf32>
      %108 = vector.shape_cast %107 : vector<1x8x128xf32> to vector<8x128xf32>
      %109 = vector.shape_cast %106 : vector<8x128xf32> to vector<1x8x128xf32>
      tpu.vector_store %arg4[%c0_65, %c0_66, %c0_67], %109 {strides = array<i32>} : memref<1x8x128xf32, #tpu.memory_space<vmem>>, vector<1x8x128xf32>,
    } else {
    }
    return
  }
  func.func @transform_0(%arg0: i32, %arg1: i32) -> (i32, i32, i32) {
    %c0_i32 = arith.constant 0 : i32
    %c0_i32_0 = arith.constant 0 : i32
    return %arg0, %arg1, %c0_i32 : i32, i32, i32
  }
  func.func @transform_1(%arg0: i32, %arg1: i32) -> (i32, i32, i32) {
    %c0_i32 = arith.constant 0 : i32
    %c0_i32_0 = arith.constant 0 : i32
    return %arg0, %arg1, %c0_i32 : i32, i32, i32
  }
  func.func @transform_2(%arg0: i32, %arg1: i32) -> (i32, i32, i32) {
    %c0_i32 = arith.constant 0 : i32
    %c0_i32_0 = arith.constant 0 : i32
    %c0_i32_1 = arith.constant 0 : i32
    return %arg0, %c0_i32, %c0_i32_0 : i32, i32, i32
  }
}

</mosaic_0001>

<llo_original>
// kernel: tpu_custom_call.1
$region0: #{tpu_custom_call.1}
  #allocation0 [shape = 'u32[]', space=smem, size = 0x4, offset = 0x4, fixed_abs, tag = 'smem constant byte address 0x4 - core index']
  #allocation1 [shape = 'u32[144,128]{1,0:T(1,128)}', space=vmem, size = 0x12000, scoped, tag = 'internal scratch']
  #allocation2 [shape = 'f32[5,8,128]{2,1,0:T(8,128)}', space=vmem, size = 0x5000, scoped, tag = 'scratch operand']
  %s0 = inlined_call_operand.hbm [shape: f32[2,8,128], index: 0, kind: input, shape index: {}]
  %s1 = inlined_call_operand.hbm [shape: f32[2,8,128], index: 1, kind: input, shape index: {}]
  %s2 = inlined_call_operand.hbm [shape: f32[2,8,128], index: 2, kind: output, shape index: {}]
  %s3 = sld [smem:[#allocation0]]
  $region57: #{tpu_custom_call.1} parent=0
    _
  %s5 = ssub.s32 1, %s3
  %s6 = scalar_select 0, %s5, %s3
  $region1: #{tpu_custom_call.1} parent=0
    #allocation3 [shape = 'u8[8192]{0}', space=vmem, size = 0x2000, scoped, tag = 'input window, operand 0']
    #allocation4 [shape = 's32[2]{0}', space=sflag, size = 0x8, scoped, tag = 'scoped memory for tpu_custom_call.1']
    #allocation5 [shape = 's32[2]{0}', space=sflag, size = 0x8, scoped, tag = 'scoped memory for tpu_custom_call.1']
    #allocation6 [shape = 'u8[8192]{0}', space=vmem, size = 0x2000, scoped, tag = 'input window, operand 1']
    #allocation7 [shape = 's32[2]{0}', space=sflag, size = 0x8, scoped, tag = 'scoped memory for tpu_custom_call.1']
    #allocation8 [shape = 'u8[8192]{0}', space=vmem, size = 0x2000, scoped, tag = 'output window, operand 0']
    %7 = vsyncpa [#allocation4], 0
    %s8 = scalar_lea.sflag [#allocation4], 1
    %9 = vsyncpa %s8, 0
    %10 = vsyncpa [#allocation7], 0
    %s11 = scalar_lea.sflag [#allocation7], 1
    %12 = vsyncpa %s11, 0
    %13 = vsyncpa [#allocation5], 0
    %s14 = scalar_lea.sflag [#allocation5], 1
    %15 = vsyncpa %s14, 0
    loop: start=0, step=1, limit=4
    $region2: #{tpu_custom_call.1} parent=1 // loop_pre_header
      _
    $region3: #{tpu_custom_call.1} parent=1 // loop_header
      %s17 = sphi 0, %s21
      %p18 = scmp.ge.s32.totalorder %s17, 4
      %s24 = sphi 0, %s36
      %s25 = sphi 0, %s32
      %s26 = sphi 0, %s24
      %s27 = sphi 0, %s25
      %s28 = sphi 0, %s26
      %s29 = sphi 0, %s27
      %s41 = sphi 0, %s43
      %s44 = sphi 0, %s41
      %s45 = sphi 0, %s44
      %s61 = sphi 0, %s45
      %s69 = sphi 0, %s71
      %s72 = sphi 0, %s69
      %s73 = sphi 0, %s72
      %s89 = sphi 0, %s73
      %s95 = sphi 0, %s97
      %s98 = sphi 0, %s95
      %s99 = sphi 0, %s98
      %s115 = sphi 0, %s99
    $region4: #{tpu_custom_call.1} parent=1 // loop_header_branch
      %20 = sbr.rel (%p18) target = $region8
    $region5: #{tpu_custom_call.1} parent=1 // loop_body
      %s22 = ssub.s32 %s17, 1
      %s23 = ssub.s32 %s17, 2
      %s30 = sadd.s32 1, %s25
      %p31 = scmp.ge.s32.totalorder %s30, 1
      %s32 = scalar_select %p31, 0, %s30
      %s33 = sadd.s32 1, %s24
      %s34 = scalar_select %p31, %s33, %s24
      %p35 = scmp.ge.s32.totalorder %s34, 2
      %s36 = scalar_select %p35, 0, %s34
      %s37 = ssub.s32 %s24, %s36
      %s38 = ssub.s32 %s25, %s32
      %s39 = sor.u32 %s37, %s38
      %p40 = scmp.eq.s32.totalorder %s39, 0
      %s42 = sadd.s32 %s41, 1
      %s43 = scalar_select %p40, %s41, %s42
      %p46 = pneg %p40
      %p47 = scmp.eq.s32.totalorder %s17, 1
      %p48 = por %p46, %p47
      %p49 = scmp.ne.s32.totalorder %s41, %s44
      %p50 = scmp.eq.s32.totalorder %s17, 0
      %p51 = por %p49, %p50
      %p52 = scmp.ne.s32.totalorder %s41, %s44
      %p53 = scmp.eq.s32.totalorder %s22, 1
      %p54 = por %p52, %p53
      %p55 = scmp.ne.s32.totalorder %s44, %s45
      %p56 = scmp.eq.s32.totalorder %s22, 0
      %p57 = por %p55, %p56
      %p58 = scmp.ne.s32.totalorder %s44, %s45
      %p59 = scmp.eq.s32.totalorder %s23, 1
      %p60 = por %p58, %p59
      %p62 = scmp.ne.s32.totalorder %s45, %s61
      %p63 = scmp.eq.s32.totalorder %s23, 0
      %p64 = por %p62, %p63
      %s65 = ssub.s32 %s24, %s36
      %s66 = ssub.s32 %s25, %s32
      %s67 = sor.u32 %s65, %s66
      %p68 = scmp.eq.s32.totalorder %s67, 0
      %s70 = sadd.s32 %s69, 1
      %s71 = scalar_select %p68, %s69, %s70
      %p74 = pneg %p68
      %p75 = scmp.eq.s32.totalorder %s17, 1
      %p76 = por %p74, %p75
      %p77 = scmp.ne.s32.totalorder %s69, %s72
      %p78 = scmp.eq.s32.totalorder %s17, 0
      %p79 = por %p77, %p78
      %p80 = scmp.ne.s32.totalorder %s69, %s72
      %p81 = scmp.eq.s32.totalorder %s22, 1
      %p82 = por %p80, %p81
      %p83 = scmp.ne.s32.totalorder %s72, %s73
      %p84 = scmp.eq.s32.totalorder %s22, 0
      %p85 = por %p83, %p84
      %p86 = scmp.ne.s32.totalorder %s72, %s73
      %p87 = scmp.eq.s32.totalorder %s23, 1
      %p88 = por %p86, %p87
      %p90 = scmp.ne.s32.totalorder %s73, %s89
      %p91 = scmp.eq.s32.totalorder %s23, 0
      %p92 = por %p90, %p91
      %s93 = ssub.s32 %s24, %s36
      %p94 = scmp.eq.s32.totalorder %s93, 0
      %s96 = sadd.s32 %s95, 1
      %s97 = scalar_select %p94, %s95, %s96
      %p100 = pneg %p94
      %p101 = scmp.eq.s32.totalorder %s17, 1
      %p102 = por %p100, %p101
      %p103 = scmp.ne.s32.totalorder %s95, %s98
      %p104 = scmp.eq.s32.totalorder %s17, 0
      %p105 = por %p103, %p104
      %p106 = scmp.ne.s32.totalorder %s95, %s98
      %p107 = scmp.eq.s32.totalorder %s22, 1
      %p108 = por %p106, %p107
      %p109 = scmp.ne.s32.totalorder %s98, %s99
      %p110 = scmp.eq.s32.totalorder %s22, 0
      %p111 = por %p109, %p110
      %p112 = scmp.ne.s32.totalorder %s98, %s99
      %p113 = scmp.eq.s32.totalorder %s23, 1
      %p114 = por %p112, %p113
      %p116 = scmp.ne.s32.totalorder %s99, %s115
      %p117 = scmp.eq.s32.totalorder %s23, 0
      %p118 = por %p116, %p117
      %p119 = scmp.le.s32.totalorder 1, %s17
      %p120 = scmp.lt.s32.totalorder %s17, 3
      %p121 = pnand %p119, %p120
      %p122 = pneg %p121
      // Predicated region
      $region9: #{tpu_custom_call.1} parent=5 // pred_check
        _
      $region10: #{tpu_custom_call.1} parent=5 // pred_check_branch
        %124 = sbr.rel (%p121) target = $region12
      $region11: #{tpu_custom_call.1} parent=5 // pred_region
        %s125 = ssub.s32 %s17, 1
      $region12: #{tpu_custom_call.1} parent=5 // pred_fallthru
        _
      %p126 = scmp.lt.s32.totalorder %s17, 2
      // Predicated region
      $region13: #{tpu_custom_call.1} parent=5 // pred_check
        %p127 = pneg %p126
      $region14: #{tpu_custom_call.1} parent=5 // pred_check_branch
        %129 = sbr.rel (%p127) target = $region16
      $region15: #{tpu_custom_call.1} parent=5 // pred_region
        // Predicated region
        $region17: #{tpu_custom_call.1} parent=15 // pred_check
          %p130 = pneg %p51
        $region18: #{tpu_custom_call.1} parent=15 // pred_check_branch
          %132 = sbr.rel (%p130) target = $region20
        $region19: #{tpu_custom_call.1} parent=15 // pred_region
          %s133 = sand.u32 %s41, 1
          %s134 = scalar_lea.sflag [#allocation4], %s133
          %s135 = sand.u32 %s41, 1
          %s136 = smul.addr %s135, 8
          %s137 = scalar_lea.vmem [#allocation3], %s136
          %s139 = ssub.s32 128, 128
          %140 = vsyncadd %s134, %s139
          %s141 = sadd.s32 %s25, %s24
          %s142 = smul.addr %s141, 128
          %s143 = scalar_lea.hbm %s0, %s142
          %s145 = sshll.u32 %s137, 4
          %s146 = int_to_ptr.vmem [resolvable:$true] %s145
          %148 = dma.hbm_to_vmem [thread:$0]  %s143, 128, %s146, %s134
        $region20: #{tpu_custom_call.1} parent=15 // pred_fallthru
          _
        // Predicated region
        $region21: #{tpu_custom_call.1} parent=15 // pred_check
          %p149 = pneg %p79
        $region22: #{tpu_custom_call.1} parent=15 // pred_check_branch
          %151 = sbr.rel (%p149) target = $region24
        $region23: #{tpu_custom_call.1} parent=15 // pred_region
          %s152 = sand.u32 %s69, 1
          %s153 = scalar_lea.sflag [#allocation7], %s152
          %s154 = sand.u32 %s69, 1
          %s155 = smul.addr %s154, 8
          %s156 = scalar_lea.vmem [#allocation6], %s155
          %s158 = ssub.s32 128, 128
          %159 = vsyncadd %s153, %s158
          %s160 = sadd.s32 %s25, %s24
          %s161 = smul.addr %s160, 128
          %s162 = scalar_lea.hbm %s1, %s161
          %s164 = sshll.u32 %s156, 4
          %s165 = int_to_ptr.vmem [resolvable:$true] %s164
          %167 = dma.hbm_to_vmem [thread:$0]  %s162, 128, %s165, %s153
        $region24: #{tpu_custom_call.1} parent=15 // pred_fallthru
          _
      $region16: #{tpu_custom_call.1} parent=5 // pred_fallthru
        _
      %p168 = scmp.le.s32.totalorder 1, %s17
      %p169 = scmp.lt.s32.totalorder %s17, 3
      %p170 = pnand %p168, %p169
      %p171 = pneg %p170
      // Predicated region
      $region25: #{tpu_custom_call.1} parent=5 // pred_check
        _
      $region26: #{tpu_custom_call.1} parent=5 // pred_check_branch
        %173 = sbr.rel (%p170) target = $region28
      $region27: #{tpu_custom_call.1} parent=5 // pred_region
        %s174 = ssub.s32 %s17, 1
        %s175 = sand.u32 %s44, 1
        %s176 = scalar_lea.sflag [#allocation4], %s175
        %s177 = sand.u32 %s44, 1
        %s178 = smul.addr %s177, 8
        %s179 = scalar_lea.vmem [#allocation3], %s178
        // Predicated region
        $region29: #{tpu_custom_call.1} parent=27 // pred_check
          %p180 = pneg %p57
        $region30: #{tpu_custom_call.1} parent=27 // pred_check_branch
          %182 = sbr.rel (%p180) target = $region32
        $region31: #{tpu_custom_call.1} parent=27 // pred_region
          %183 = dma.done %s176, 128
        $region32: #{tpu_custom_call.1} parent=27 // pred_fallthru
          _
        %s184 = sand.u32 %s72, 1
        %s185 = scalar_lea.sflag [#allocation7], %s184
        %s186 = sand.u32 %s72, 1
        %s187 = smul.addr %s186, 8
        %s188 = scalar_lea.vmem [#allocation6], %s187
        // Predicated region
        $region33: #{tpu_custom_call.1} parent=27 // pred_check
          %p189 = pneg %p85
        $region34: #{tpu_custom_call.1} parent=27 // pred_check_branch
          %191 = sbr.rel (%p189) target = $region36
        $region35: #{tpu_custom_call.1} parent=27 // pred_region
          %192 = dma.done %s185, 128
        $region36: #{tpu_custom_call.1} parent=27 // pred_fallthru
          _
        %s193 = sand.u32 %s44, 1
        %s194 = scalar_lea.sflag [#allocation4], %s193
        %s195 = sand.u32 %s44, 1
        %s196 = smul.addr %s195, 8
        %s197 = scalar_lea.vmem [#allocation3], %s196
        %p198 = pneg %p57
        %p199 = pneg %p54
        %s200 = sand.u32 %s72, 1
        %s201 = scalar_lea.sflag [#allocation7], %s200
        %s202 = sand.u32 %s72, 1
        %s203 = smul.addr %s202, 8
        %s204 = scalar_lea.vmem [#allocation6], %s203
        %p205 = pneg %p85
        %p206 = pneg %p82
        %p207 = pneg %p111
        %p208 = pneg %p108
        %s209 = sand.u32 %s98, 1
        %s210 = scalar_lea.sflag [#allocation5], %s209
        %s211 = sand.u32 %s98, 1
        %s212 = smul.addr %s211, 8
        %s213 = scalar_lea.vmem [#allocation8], %s212
        %v214 = vld [vmem:[%s179] sm:$0xff]
        %v215 = vld [vmem:[%s188] sm:$0xff]
        %v216 = vadd.f32 %v214, 0.0
        %v217 = vadd.f32 %v216, 0.0
        %v218 = vadd.f32 %v215, 0.0
        %v219 = vadd.f32 %v218, 0.0
        %v220 = vmul.f32 %v214, %v214
        %v221 = vadd.f32 %v220, 0.0
        %v222 = vadd.f32 %v221, 0.0
        %v223 = vmul.f32 %v215, %v215
        %v224 = vadd.f32 %v223, 0.0
        %v225 = vadd.f32 %v224, 0.0
        %v226 = vmul.f32 %v214, %v215
        %v227 = vadd.f32 %v226, 0.0
        %v228 = vadd.f32 %v227, 0.0
        %p229 = scmp.eq.s32.totalorder %s27, 0
        // Predicated region
        $region37: #{tpu_custom_call.1} parent=27 // pred_check
          %p230 = pneg %p229
        $region38: #{tpu_custom_call.1} parent=27 // pred_check_branch
          %232 = sbr.rel (%p230) target = $region40
        $region39: #{tpu_custom_call.1} parent=27 // pred_region
          %233 = vst [vmem:[#allocation2] sm:$0xff] 0.0
          %234 = vst [vmem:[#allocation2 + $0x8] sm:$0xff] 0.0
          %235 = vst [vmem:[#allocation2 + $0x10] sm:$0xff] 0.0
          %236 = vst [vmem:[#allocation2 + $0x18] sm:$0xff] 0.0
          %237 = vst [vmem:[#allocation2 + $0x20] sm:$0xff] 0.0
        $region40: #{tpu_custom_call.1} parent=27 // pred_fallthru
          _
        %v238 = vld [vmem:[#allocation2] sm:$0xff]
        %v239 = vadd.f32 %v238, %v217
        %240 = vst [vmem:[#allocation2] sm:$0xff] %v239
        %s241 = scalar_lea.vmem [#allocation2], 8
        %v242 = vld [vmem:[%s241] sm:$0xff]
        %v243 = vadd.f32 %v242, %v219
        %244 = vst [vmem:[%s241] sm:$0xff] %v243
        %s245 = scalar_lea.vmem [#allocation2], 16
        %v246 = vld [vmem:[%s245] sm:$0xff]
        %v247 = vadd.f32 %v246, %v222
        %248 = vst [vmem:[%s245] sm:$0xff] %v247
        %s249 = scalar_lea.vmem [#allocation2], 24
        %v250 = vld [vmem:[%s249] sm:$0xff]
        %v251 = vadd.f32 %v250, %v225
        %252 = vst [vmem:[%s249] sm:$0xff] %v251
        %s253 = scalar_lea.vmem [#allocation2], 32
        %v254 = vld [vmem:[%s253] sm:$0xff]
        %v255 = vadd.f32 %v254, %v228
        %256 = vst [vmem:[%s253] sm:$0xff] %v255
        // Predicated region
        $region41: #{tpu_custom_call.1} parent=27 // pred_check
          %p257 = pneg %p229
        $region42: #{tpu_custom_call.1} parent=27 // pred_check_branch
          %259 = sbr.rel (%p257) target = $region44
        $region43: #{tpu_custom_call.1} parent=27 // pred_region
          %v260 = vld [vmem:[#allocation2] sm:$0xff]
          %261 = vadd.xlane.f32.xlu0 %v260
          %v262 = vpop.xlane.xlu0 %261
          %v263 = vrot.slane %v262, 4
          %v264 = vadd.f32 %v262, %v263
          %v265 = vrot.slane %v264, 2
          %v266 = vadd.f32 %v264, %v265
          %v267 = vrot.slane %v266, 1
          %v268 = vadd.f32 %v266, %v267
          %s269 = vtos %v268
          %v270 = vld [vmem:[%s241] sm:$0xff]
          %271 = vadd.xlane.f32.xlu0 %v270
          %v272 = vpop.xlane.xlu0 %271
          %v273 = vrot.slane %v272, 4
          %v274 = vadd.f32 %v272, %v273
          %v275 = vrot.slane %v274, 2
          %v276 = vadd.f32 %v274, %v275
          %v277 = vrot.slane %v276, 1
          %v278 = vadd.f32 %v276, %v277
          %s279 = vtos %v278
          %v280 = vld [vmem:[%s245] sm:$0xff]
          %281 = vadd.xlane.f32.xlu0 %v280
          %v282 = vpop.xlane.xlu0 %281
          %v283 = vrot.slane %v282, 4
          %v284 = vadd.f32 %v282, %v283
          %v285 = vrot.slane %v284, 2
          %v286 = vadd.f32 %v284, %v285
          %v287 = vrot.slane %v286, 1
          %v288 = vadd.f32 %v286, %v287
          %s289 = vtos %v288
          %v290 = vld [vmem:[%s249] sm:$0xff]
          %291 = vadd.xlane.f32.xlu0 %v290
          %v292 = vpop.xlane.xlu0 %291
          %v293 = vrot.slane %v292, 4
          %v294 = vadd.f32 %v292, %v293
          %v295 = vrot.slane %v294, 2
          %v296 = vadd.f32 %v294, %v295
          %v297 = vrot.slane %v296, 1
          %v298 = vadd.f32 %v296, %v297
          %s299 = vtos %v298
          %v300 = vld [vmem:[%s253] sm:$0xff]
          %301 = vadd.xlane.f32.xlu0 %v300
          %v302 = vpop.xlane.xlu0 %301
          %v303 = vrot.slane %v302, 4
          %v304 = vadd.f32 %v302, %v303
          %v305 = vrot.slane %v304, 2
          %v306 = vadd.f32 %v304, %v305
          %v307 = vrot.slane %v306, 1
          %v308 = vadd.f32 %v306, %v307
          %s309 = vtos %v308
          %s310 = smul.f32 %s269, 0.0009765625
          %s311 = smul.f32 %s279, 0.0009765625
          %s312 = smul.f32 %s309, 0.0009765625
          %s313 = smul.f32 %s310, %s311
          %s314 = ssub.f32 %s312, %s313
          %s315 = smul.f32 %s289, 0.0009765625
          %s316 = smul.f32 %s310, %s310
          %s317 = ssub.f32 %s315, %s316
          %s318 = smax.f32 %s317, 0.0
          %s319 = smul.f32 %s299, 0.0009765625
          %s320 = smul.f32 %s311, %s311
          %s321 = ssub.f32 %s319, %s320
          %s322 = smax.f32 %s321, 0.0
          %s323 = smul.f32 %s318, %s322
          %v324 = vstv %s323
          %v325 = vrsqrt.pop %v324
          %v326 = vmul.f32 %v324, %v325
          %vm327 = vcmp.eq.f32.partialorder %v324, inf
          %v328 = vsel %vm327, %v324, %v326
          %vm329 = vcmp.eq.f32.partialorder %v324, 0.0
          %v330 = vand.u32 %v324, 2147483648
          %v331 = vsel %vm329, %v330, %v328
          %s332 = vtos %v331
          %v333 = vstv %s332
          %v334 = vrcp.pop %v333
          %s335 = vtos %v334
          %s336 = smul.f32 %s314, %s335
          %v337 = vstv %s336
          %338 = vst [vmem:[%s213] sm:$0xff] %v337
        $region44: #{tpu_custom_call.1} parent=27 // pred_fallthru
          _
        %s339 = sand.u32 %s98, 1
        %s340 = scalar_lea.sflag [#allocation5], %s339
        %s341 = sand.u32 %s98, 1
        %s342 = smul.addr %s341, 8
        %s343 = scalar_lea.vmem [#allocation8], %s342
        // Predicated region
        $region45: #{tpu_custom_call.1} parent=27 // pred_check
          %p344 = pneg %p108
        $region46: #{tpu_custom_call.1} parent=27 // pred_check_branch
          %346 = sbr.rel (%p344) target = $region48
        $region47: #{tpu_custom_call.1} parent=27 // pred_region
          %s348 = ssub.s32 128, 128
          %349 = vsyncadd %s340, %s348
          %s350 = smul.addr %s26, 128
          %s351 = scalar_lea.hbm %s2, %s350
          %s353 = sshll.u32 %s343, 4
          %s354 = int_to_ptr.vmem [resolvable:$true] %s353
          %356 = dma.vmem_to_hbm [thread:$0]  %s354, 128, %s351, %s340
        $region48: #{tpu_custom_call.1} parent=27 // pred_fallthru
          _
      $region28: #{tpu_custom_call.1} parent=5 // pred_fallthru
        _
      %p357 = scmp.le.s32.totalorder 2, %s17
      // Predicated region
      $region49: #{tpu_custom_call.1} parent=5 // pred_check
        %p358 = pneg %p357
      $region50: #{tpu_custom_call.1} parent=5 // pred_check_branch
        %360 = sbr.rel (%p358) target = $region52
      $region51: #{tpu_custom_call.1} parent=5 // pred_region
        %s361 = ssub.s32 %s17, 2
        // Predicated region
        $region53: #{tpu_custom_call.1} parent=51 // pred_check
          %p362 = pneg %p114
        $region54: #{tpu_custom_call.1} parent=51 // pred_check_branch
          %364 = sbr.rel (%p362) target = $region56
        $region55: #{tpu_custom_call.1} parent=51 // pred_region
          %s365 = sand.u32 %s99, 1
          %s366 = scalar_lea.sflag [#allocation5], %s365
          %s367 = sand.u32 %s99, 1
          %s368 = smul.addr %s367, 8
          %s369 = scalar_lea.vmem [#allocation8], %s368
          %370 = dma.done %s366, 128
        $region56: #{tpu_custom_call.1} parent=51 // pred_fallthru
          _
      $region52: #{tpu_custom_call.1} parent=5 // pred_fallthru
        _
    $region6: #{tpu_custom_call.1} parent=1 // loop_footer
      %s21 = sadd.s32 1, %s17
    $region7: #{tpu_custom_call.1} parent=1 // loop_footer_branch
      %16 = sbr.rel target = $region3
    $region8: #{tpu_custom_call.1} parent=1 // loop_exit
      _
    %371 = vsyncpa [#allocation4], 1
    %s372 = scalar_lea.sflag [#allocation4], 1
    %373 = vsyncpa %s372, 1
    %374 = vsyncpa [#allocation7], 1
    %s375 = scalar_lea.sflag [#allocation7], 1
    %376 = vsyncpa %s375, 1
    %377 = vsyncpa [#allocation5], 1
    %s378 = scalar_lea.sflag [#allocation5], 1
    %379 = vsyncpa %s378, 1

</llo_original>
